<compile_context>
chip_gen: v7x
topology: tpu7x:2x2x1
jax: 0.10.0
libtpu: 0.0.40
codegen_flags: <defaults>
</compile_context>

<pallas_src>
import functools

import jax
import jax.numpy as jnp
from jax.experimental import pallas as pl
from jax.experimental.pallas import tpu as pltpu

_LANES = 128


def _round_up(n, m):
    return (n + m - 1) // m * m


def mlp_kernel(params_ref, x_ref, o_ref, *, compute_dtype):
    # params_ref: SMEM f32[27], packed as
    #   w1[j, i] at 2*j + i       (j in 0..3, i in 0..1)
    #   b1[j]    at 8 + j
    #   w2[k, j] at 12 + 4*k + j  (k in 0..2, j in 0..3)
    #   b2[k]    at 24 + k
    # x_ref: VMEM [2, TR, 128]  (features, batch-rows, batch-lanes)
    # o_ref: VMEM [3, TR, 128]  (classes,  batch-rows, batch-lanes)
    cd = compute_dtype

    def p(i):
        return params_ref[i].astype(cd)

    x0 = x_ref[0].astype(cd)                   # [TR, 128], fully dense vregs
    x1 = x_ref[1].astype(cd)

    # layer_1 + ReLU: unrolled broadcast-MACs on the VPU (MXU would be idle).
    h = []
    for j in range(4):
        hj = p(2 * j) * x0 + p(2 * j + 1) * x1 + p(8 + j)
        h.append(jnp.maximum(hj, 0.0))

    # layer_out: logits_k = sum_{j=0..3} w2[k, j] * h_j + b2[k]
    logits = []
    for k in range(3):
        lk = p(12 + 4 * k + 0) * h[0]
        lk = lk + p(12 + 4 * k + 1) * h[1]
        lk = lk + p(12 + 4 * k + 2) * h[2]
        lk = lk + p(12 + 4 * k + 3) * h[3]     # <-- term that was missing before
        lk = lk + p(24 + k)
        logits.append(lk.astype(jnp.float32))  # softmax always in f32

    # Softmax over the 3 classes (per batch element): pairwise VPU max,
    # EUP exp, running exp-sum (short live-range chain), exact reciprocal.
    m = jnp.maximum(jnp.maximum(logits[0], logits[1]), logits[2])
    e0 = jnp.exp(logits[0] - m)
    s = e0
    e1 = jnp.exp(logits[1] - m)
    s = s + e1
    e2 = jnp.exp(logits[2] - m)
    s = s + e2
    inv = pl.reciprocal(s)                     # exact: rows sum to 1
    o_ref[0] = (e0 * inv).astype(o_ref.dtype)  # lane-dense stores (last dim 128)
    o_ref[1] = (e1 * inv).astype(o_ref.dtype)
    o_ref[2] = (e2 * inv).astype(o_ref.dtype)


def _pack_params(w1, b1, w2, b2):
    # One f32[27] vector, resident in SMEM across all grid steps.
    return jnp.concatenate([
        jnp.asarray(w1, jnp.float32).reshape(-1),   # [8]
        jnp.asarray(b1, jnp.float32).reshape(-1),   # [4]
        jnp.asarray(w2, jnp.float32).reshape(-1),   # [12]
        jnp.asarray(b2, jnp.float32).reshape(-1),   # [3]
    ])                                              # [27]


def _multi_class_net_planar(x3, params, *, block_rows, compute_dtype, out_dtype):
    """Core Pallas call on the feature-major planar layout.

    x3: [2, rows, 128] with rows % 8 == 0.  Returns [3, rows, 128] softmax
    probabilities.  No wrapper layout passes: layout-aware callers should use
    this directly to avoid the extra HBM read/write of a transpose/pad.
    """
    F, rows, lanes = x3.shape
    assert lanes == _LANES and rows % 8 == 0

    tile_r = min(block_rows, rows)
    while rows % tile_r:            # largest multiple-of-8 tile dividing rows
        tile_r -= 8
    grid = (rows // tile_r,)

    # Double-buffered I/O per step: (2 in + 3 out) planes * tile_r * 128 * 4B * 2.
    io_bytes = (F + 3) * tile_r * _LANES * 4 * 2
    vmem_limit = int(min(max(2 * io_bytes, 16 << 20), 48 << 20))  # v7x-safe

    return pl.pallas_call(
        functools.partial(mlp_kernel, compute_dtype=compute_dtype),
        out_shape=jax.ShapeDtypeStruct((3, rows, _LANES), out_dtype),
        grid=grid,
        in_specs=[
            pl.BlockSpec(memory_space=pltpu.MemorySpace.SMEM),        # params
            pl.BlockSpec((F, tile_r, _LANES), lambda i: (0, i, 0)),   # x tile
        ],
        out_specs=pl.BlockSpec((3, tile_r, _LANES), lambda i: (0, i, 0)),
        compiler_params=pltpu.CompilerParams(
            dimension_semantics=("parallel",),   # batch axis -> both TCs on v7x
            vmem_limit_bytes=vmem_limit,
        ),
    )(params, x3)


@functools.partial(jax.jit, static_argnames=("block_rows", "compute_dtype"))
def multi_class_net(x, w1, b1, w2, b2, *, block_rows=1024,
                    compute_dtype=jnp.float32):
    """Forward pass of MultiClassNet.

    Args:
      x:  [B, 2] input (any float dtype; cast happens inside the kernel)
      w1: [4, 2] (PyTorch Linear layout [out, in]),  b1: [4]
      w2: [3, 4],                                    b2: [3]
      block_rows: batch tile size in units of 128-wide rows (multiple of 8).
      compute_dtype: MAC dtype; jnp.bfloat16 halves VALU cost on v6e/v7x
        (softmax stays f32 either way).
    Returns:
      [B, 3] softmax probabilities (same dtype as x).

    Note: for throughput-critical pipelines keep activations in the
    feature-major [2, rows, 128] layout and call _multi_class_net_planar
    directly; the [B,2] <-> planar transposes here cost one extra HBM pass.
    For tiny batches plain jnp is cheaper than any kernel launch.
    """
    B, F = x.shape
    assert F == 2 and w1.shape == (4, 2) and w2.shape == (3, 4)
    assert block_rows % 8 == 0

    params = _pack_params(w1, b1, w2, b2)

    # Layout plumbing: put batch on lanes AND sublanes so vregs are dense.
    rows = pl.cdiv(B, _LANES)
    tile_r = min(block_rows, _round_up(rows, 8))
    rows_pad = _round_up(rows, tile_r)
    b_pad = rows_pad * _LANES

    x_t = jnp.pad(jnp.transpose(x), ((0, 0), (0, b_pad - B)))   # [2, b_pad]
    x3 = x_t.reshape(F, rows_pad, _LANES)                       # [2, rows, 128]

    out3 = _multi_class_net_planar(
        x3, params, block_rows=tile_r, compute_dtype=compute_dtype,
        out_dtype=x.dtype)

    # [3, b_pad] -> [B, 3]
    return out3.reshape(3, b_pad)[:, :B].T


if __name__ == "__main__":
    key = jax.random.PRNGKey(0)
    k_x, k_w1, k_b1, k_w2, k_b2 = jax.random.split(key, 5)

    num_features = 2
    batch = 2000    # not a multiple of 128 -> exercises padding; one grid step

    # Deterministic synthetic weights (PyTorch nn.Linear shapes: [out, in]).
    x = jax.random.normal(k_x, (batch, num_features), dtype=jnp.float32)
    w1 = jax.random.normal(k_w1, (4, num_features), dtype=jnp.float32) * 0.5
    b1 = jax.random.normal(k_b1, (4,), dtype=jnp.float32) * 0.1
    w2 = jax.random.normal(k_w2, (3, 4), dtype=jnp.float32) * 0.5
    b2 = jax.random.normal(k_b2, (3,), dtype=jnp.float32) * 0.1

    out = multi_class_net(x, w1, b1, w2, b2)
    out = jax.block_until_ready(out)

    # Reference in plain JAX (same math as the PyTorch module).
    h_ref = jnp.maximum(x @ w1.T + b1, 0.0)
    ref = jax.nn.softmax(h_ref @ w2.T + b2, axis=1)

    assert out.shape == (batch, 3)
    assert jnp.allclose(out, ref, atol=1e-4), "mismatch vs reference"
    assert jnp.allclose(jnp.sum(out, axis=1), 1.0, atol=1e-4)

    print("KERNEL_OK")
</pallas_src>

<mosaic_0001>
module attributes {stable_mosaic.version = 11 : i64} {
  func.func @mlp_kernel(%arg0: i32, %arg1: memref<27xf32, #tpu.memory_space<smem>>, %arg2: memref<2x16x128xf32, #tpu.memory_space<vmem>>, %arg3: memref<3x16x128xf32, #tpu.memory_space<vmem>>) attributes {dimension_semantics = [#tpu.dimension_semantics<parallel>], iteration_bounds = array<i64: 1>, scalar_prefetch = 0 : i64, scratch_operands = 0 : i64, tpu.core_type = #tpu.core_type<tc>, window_params = [{transform_indices = @transform_0, window_bounds = array<i64: 27>}, {transform_indices = @transform_1, window_bounds = array<i64: 2, 16, 128>}, {transform_indices = @transform_2, window_bounds = array<i64: 3, 16, 128>}]} {
    %c0 = arith.constant 0 : index
    %c0_0 = arith.constant 0 : index
    %c0_1 = arith.constant 0 : index
    %0 = vector.load %arg2[%c0, %c0_0, %c0_1] : memref<2x16x128xf32, #tpu.memory_space<vmem>>, vector<1x16x128xf32>
    %1 = vector.shape_cast %0 : vector<1x16x128xf32> to vector<16x128xf32>
    %c1 = arith.constant 1 : index
    %c0_2 = arith.constant 0 : index
    %c0_3 = arith.constant 0 : index
    %2 = vector.load %arg2[%c1, %c0_2, %c0_3] : memref<2x16x128xf32, #tpu.memory_space<vmem>>, vector<1x16x128xf32>
    %3 = vector.shape_cast %2 : vector<1x16x128xf32> to vector<16x128xf32>
    %c0_4 = arith.constant 0 : index
    %4 = memref.load %arg1[%c0_4] : memref<27xf32, #tpu.memory_space<smem>>
    %5 = vector.broadcast %4 : f32 to vector<16x128xf32>
    %6 = arith.mulf %5, %1 : vector<16x128xf32>
    %c1_5 = arith.constant 1 : index
    %7 = memref.load %arg1[%c1_5] : memref<27xf32, #tpu.memory_space<smem>>
    %8 = vector.broadcast %7 : f32 to vector<16x128xf32>
    %9 = arith.mulf %8, %3 : vector<16x128xf32>
    %10 = arith.addf %6, %9 : vector<16x128xf32>
    %c8 = arith.constant 8 : index
    %11 = memref.load %arg1[%c8] : memref<27xf32, #tpu.memory_space<smem>>
    %12 = vector.broadcast %11 : f32 to vector<16x128xf32>
    %13 = arith.addf %10, %12 : vector<16x128xf32>
    %cst = arith.constant 0.000000e+00 : f32
    %14 = vector.broadcast %cst : f32 to vector<16x128xf32>
    %15 = arith.maximumf %13, %14 : vector<16x128xf32>
    %c2 = arith.constant 2 : index
    %16 = memref.load %arg1[%c2] : memref<27xf32, #tpu.memory_space<smem>>
    %17 = vector.broadcast %16 : f32 to vector<16x128xf32>
    %18 = arith.mulf %17, %1 : vector<16x128xf32>
    %c3 = arith.constant 3 : index
    %19 = memref.load %arg1[%c3] : memref<27xf32, #tpu.memory_space<smem>>
    %20 = vector.broadcast %19 : f32 to vector<16x128xf32>
    %21 = arith.mulf %20, %3 : vector<16x128xf32>
    %22 = arith.addf %18, %21 : vector<16x128xf32>
    %c9 = arith.constant 9 : index
    %23 = memref.load %arg1[%c9] : memref<27xf32, #tpu.memory_space<smem>>
    %24 = vector.broadcast %23 : f32 to vector<16x128xf32>
    %25 = arith.addf %22, %24 : vector<16x128xf32>
    %cst_6 = arith.constant 0.000000e+00 : f32
    %26 = vector.broadcast %cst_6 : f32 to vector<16x128xf32>
    %27 = arith.maximumf %25, %26 : vector<16x128xf32>
    %c4 = arith.constant 4 : index
    %28 = memref.load %arg1[%c4] : memref<27xf32, #tpu.memory_space<smem>>
    %29 = vector.broadcast %28 : f32 to vector<16x128xf32>
    %30 = arith.mulf %29, %1 : vector<16x128xf32>
    %c5 = arith.constant 5 : index
    %31 = memref.load %arg1[%c5] : memref<27xf32, #tpu.memory_space<smem>>
    %32 = vector.broadcast %31 : f32 to vector<16x128xf32>
    %33 = arith.mulf %32, %3 : vector<16x128xf32>
    %34 = arith.addf %30, %33 : vector<16x128xf32>
    %c10 = arith.constant 10 : index
    %35 = memref.load %arg1[%c10] : memref<27xf32, #tpu.memory_space<smem>>
    %36 = vector.broadcast %35 : f32 to vector<16x128xf32>
    %37 = arith.addf %34, %36 : vector<16x128xf32>
    %cst_7 = arith.constant 0.000000e+00 : f32
    %38 = vector.broadcast %cst_7 : f32 to vector<16x128xf32>
    %39 = arith.maximumf %37, %38 : vector<16x128xf32>
    %c6 = arith.constant 6 : index
    %40 = memref.load %arg1[%c6] : memref<27xf32, #tpu.memory_space<smem>>
    %41 = vector.broadcast %40 : f32 to vector<16x128xf32>
    %42 = arith.mulf %41, %1 : vector<16x128xf32>
    %c7 = arith.constant 7 : index
    %43 = memref.load %arg1[%c7] : memref<27xf32, #tpu.memory_space<smem>>
    %44 = vector.broadcast %43 : f32 to vector<16x128xf32>
    %45 = arith.mulf %44, %3 : vector<16x128xf32>
    %46 = arith.addf %42, %45 : vector<16x128xf32>
    %c11 = arith.constant 11 : index
    %47 = memref.load %arg1[%c11] : memref<27xf32, #tpu.memory_space<smem>>
    %48 = vector.broadcast %47 : f32 to vector<16x128xf32>
    %49 = arith.addf %46, %48 : vector<16x128xf32>
    %cst_8 = arith.constant 0.000000e+00 : f32
    %50 = vector.broadcast %cst_8 : f32 to vector<16x128xf32>
    %51 = arith.maximumf %49, %50 : vector<16x128xf32>
    %c12 = arith.constant 12 : index
    %52 = memref.load %arg1[%c12] : memref<27xf32, #tpu.memory_space<smem>>
    %53 = vector.broadcast %52 : f32 to vector<16x128xf32>
    %54 = arith.mulf %53, %15 : vector<16x128xf32>
    %c13 = arith.constant 13 : index
    %55 = memref.load %arg1[%c13] : memref<27xf32, #tpu.memory_space<smem>>
    %56 = vector.broadcast %55 : f32 to vector<16x128xf32>
    %57 = arith.mulf %56, %27 : vector<16x128xf32>
    %58 = arith.addf %54, %57 : vector<16x128xf32>
    %c14 = arith.constant 14 : index
    %59 = memref.load %arg1[%c14] : memref<27xf32, #tpu.memory_space<smem>>
    %60 = vector.broadcast %59 : f32 to vector<16x128xf32>
    %61 = arith.mulf %60, %39 : vector<16x128xf32>
    %62 = arith.addf %58, %61 : vector<16x128xf32>
    %c15 = arith.constant 15 : index
    %63 = memref.load %arg1[%c15] : memref<27xf32, #tpu.memory_space<smem>>
    %64 = vector.broadcast %63 : f32 to vector<16x128xf32>
    %65 = arith.mulf %64, %51 : vector<16x128xf32>
    %66 = arith.addf %62, %65 : vector<16x128xf32>
    %c24 = arith.constant 24 : index
    %67 = memref.load %arg1[%c24] : memref<27xf32, #tpu.memory_space<smem>>
    %68 = vector.broadcast %67 : f32 to vector<16x128xf32>
    %69 = arith.addf %66, %68 : vector<16x128xf32>
    %c16 = arith.constant 16 : index
    %70 = memref.load %arg1[%c16] : memref<27xf32, #tpu.memory_space<smem>>
    %71 = vector.broadcast %70 : f32 to vector<16x128xf32>
    %72 = arith.mulf %71, %15 : vector<16x128xf32>
    %c17 = arith.constant 17 : index
    %73 = memref.load %arg1[%c17] : memref<27xf32, #tpu.memory_space<smem>>
    %74 = vector.broadcast %73 : f32 to vector<16x128xf32>
    %75 = arith.mulf %74, %27 : vector<16x128xf32>
    %76 = arith.addf %72, %75 : vector<16x128xf32>
    %c18 = arith.constant 18 : index
    %77 = memref.load %arg1[%c18] : memref<27xf32, #tpu.memory_space<smem>>
    %78 = vector.broadcast %77 : f32 to vector<16x128xf32>
    %79 = arith.mulf %78, %39 : vector<16x128xf32>
    %80 = arith.addf %76, %79 : vector<16x128xf32>
    %c19 = arith.constant 19 : index
    %81 = memref.load %arg1[%c19] : memref<27xf32, #tpu.memory_space<smem>>
    %82 = vector.broadcast %81 : f32 to vector<16x128xf32>
    %83 = arith.mulf %82, %51 : vector<16x128xf32>
    %84 = arith.addf %80, %83 : vector<16x128xf32>
    %c25 = arith.constant 25 : index
    %85 = memref.load %arg1[%c25] : memref<27xf32, #tpu.memory_space<smem>>
    %86 = vector.broadcast %85 : f32 to vector<16x128xf32>
    %87 = arith.addf %84, %86 : vector<16x128xf32>
    %c20 = arith.constant 20 : index
    %88 = memref.load %arg1[%c20] : memref<27xf32, #tpu.memory_space<smem>>
    %89 = vector.broadcast %88 : f32 to vector<16x128xf32>
    %90 = arith.mulf %89, %15 : vector<16x128xf32>
    %c21 = arith.constant 21 : index
    %91 = memref.load %arg1[%c21] : memref<27xf32, #tpu.memory_space<smem>>
    %92 = vector.broadcast %91 : f32 to vector<16x128xf32>
    %93 = arith.mulf %92, %27 : vector<16x128xf32>
    %94 = arith.addf %90, %93 : vector<16x128xf32>
    %c22 = arith.constant 22 : index
    %95 = memref.load %arg1[%c22] : memref<27xf32, #tpu.memory_space<smem>>
    %96 = vector.broadcast %95 : f32 to vector<16x128xf32>
    %97 = arith.mulf %96, %39 : vector<16x128xf32>
    %98 = arith.addf %94, %97 : vector<16x128xf32>
    %c23 = arith.constant 23 : index
    %99 = memref.load %arg1[%c23] : memref<27xf32, #tpu.memory_space<smem>>
    %100 = vector.broadcast %99 : f32 to vector<16x128xf32>
    %101 = arith.mulf %100, %51 : vector<16x128xf32>
    %102 = arith.addf %98, %101 : vector<16x128xf32>
    %c26 = arith.constant 26 : index
    %103 = memref.load %arg1[%c26] : memref<27xf32, #tpu.memory_space<smem>>
    %104 = vector.broadcast %103 : f32 to vector<16x128xf32>
    %105 = arith.addf %102, %104 : vector<16x128xf32>
    %106 = arith.maximumf %69, %87 : vector<16x128xf32>
    %107 = arith.maximumf %106, %105 : vector<16x128xf32>
    %108 = arith.subf %69, %107 : vector<16x128xf32>
    %109 = math.exp %108 : vector<16x128xf32>
    %110 = arith.subf %87, %107 : vector<16x128xf32>
    %111 = math.exp %110 : vector<16x128xf32>
    %112 = arith.addf %109, %111 : vector<16x128xf32>
    %113 = arith.subf %105, %107 : vector<16x128xf32>
    %114 = math.exp %113 : vector<16x128xf32>
    %115 = arith.addf %112, %114 : vector<16x128xf32>
    %116 = tpu.reciprocal %115 : vector<16x128xf32> -> vector<16x128xf32>
    %117 = arith.mulf %109, %116 : vector<16x128xf32>
    %c0_9 = arith.constant 0 : index
    %c0_10 = arith.constant 0 : index
    %c0_11 = arith.constant 0 : index
    %118 = vector.load %arg3[%c0_9, %c0_10, %c0_11] : memref<3x16x128xf32, #tpu.memory_space<vmem>>, vector<1x16x128xf32>
    %119 = vector.shape_cast %118 : vector<1x16x128xf32> to vector<16x128xf32>
    %120 = vector.shape_cast %117 : vector<16x128xf32> to vector<1x16x128xf32>
    tpu.vector_store %arg3[%c0_9, %c0_10, %c0_11], %120 {strides = array<i32>} : memref<3x16x128xf32, #tpu.memory_space<vmem>>, vector<1x16x128xf32>,
    %121 = arith.mulf %111, %116 : vector<16x128xf32>
    %c1_12 = arith.constant 1 : index
    %c0_13 = arith.constant 0 : index
    %c0_14 = arith.constant 0 : index
    %122 = vector.load %arg3[%c1_12, %c0_13, %c0_14] : memref<3x16x128xf32, #tpu.memory_space<vmem>>, vector<1x16x128xf32>
    %123 = vector.shape_cast %122 : vector<1x16x128xf32> to vector<16x128xf32>
    %124 = vector.shape_cast %121 : vector<16x128xf32> to vector<1x16x128xf32>
    tpu.vector_store %arg3[%c1_12, %c0_13, %c0_14], %124 {strides = array<i32>} : memref<3x16x128xf32, #tpu.memory_space<vmem>>, vector<1x16x128xf32>,
    %125 = arith.mulf %114, %116 : vector<16x128xf32>
    %c2_15 = arith.constant 2 : index
    %c0_16 = arith.constant 0 : index
    %c0_17 = arith.constant 0 : index
    %126 = vector.load %arg3[%c2_15, %c0_16, %c0_17] : memref<3x16x128xf32, #tpu.memory_space<vmem>>, vector<1x16x128xf32>
    %127 = vector.shape_cast %126 : vector<1x16x128xf32> to vector<16x128xf32>
    %128 = vector.shape_cast %125 : vector<16x128xf32> to vector<1x16x128xf32>
    tpu.vector_store %arg3[%c2_15, %c0_16, %c0_17], %128 {strides = array<i32>} : memref<3x16x128xf32, #tpu.memory_space<vmem>>, vector<1x16x128xf32>,
    return
  }
  func.func @transform_0(%arg0: i32) -> i32 {
    %c0_i32 = arith.constant 0 : i32
    %c0_i32_0 = arith.constant 0 : i32
    return %c0_i32 : i32
  }
  func.func @transform_1(%arg0: i32) -> (i32, i32, i32) {
    %c0_i32 = arith.constant 0 : i32
    %c0_i32_0 = arith.constant 0 : i32
    %c0_i32_1 = arith.constant 0 : i32
    return %c0_i32, %arg0, %c0_i32_0 : i32, i32, i32
  }
  func.func @transform_2(%arg0: i32) -> (i32, i32, i32) {
    %c0_i32 = arith.constant 0 : i32
    %c0_i32_0 = arith.constant 0 : i32
    %c0_i32_1 = arith.constant 0 : i32
    return %c0_i32, %arg0, %c0_i32_0 : i32, i32, i32
  }
}

</mosaic_0001>

<llo_original>
// kernel: multi_class_net.1
$region0: #{multi_class_net.1}
  #allocation0 [shape = 'u32[]', space=smem, size = 0x4, offset = 0x4, fixed_abs, tag = 'smem constant byte address 0x4 - core index']
  #allocation1 [shape = 'u32[144,128]{1,0:T(1,128)}', space=vmem, size = 0x12000, scoped, tag = 'internal scratch']
  %s0 = inlined_call_operand.vmem [shape: f32[27], index: 0, kind: input, shape index: {}]
  %s1 = inlined_call_operand.vmem [shape: f32[2,16,128], index: 1, kind: input, shape index: {}]
  %s2 = inlined_call_operand.vmem [shape: f32[3,16,128], index: 2, kind: output, shape index: {}]
  %s3 = sld [smem:[#allocation0]]
  $region22: #{multi_class_net.1} parent=0
    _
  %s5 = ssub.s32 1, %s3
  %s6 = scalar_select 0, %s5, %s3
  $region1: #{multi_class_net.1} parent=0
    #allocation2 [shape = 'u8[512]{0}', space=smem, size = 0x200, scoped, tag = 'input window, operand 0, single buffered']
    #allocation3 [shape = 's32[1]{0}', space=sflag, size = 0x4, scoped, tag = 'scoped memory for multi_class_net.1']
    %7 = vsyncpa [#allocation3], 0
    // Predicated region
    $region2: #{multi_class_net.1} parent=1 // pred_check
      _
    $region3: #{multi_class_net.1} parent=1 // pred_check_branch
      %9 = sbr.rel (0) target = $region5
    $region4: #{multi_class_net.1} parent=1 // pred_region
      %s11 = ssub.s32 16, 16
      %12 = vsyncadd [#allocation3], %s11
      %s14 = sshll.u32 %s0, 4
      %s15 = int_to_ptr.vmem [resolvable:$true] %s14
      %17 = dma.vmem_to_smem %s15, 16, [#allocation2], [#allocation3]
    $region5: #{multi_class_net.1} parent=1 // pred_fallthru
      _
    // Predicated region
    $region6: #{multi_class_net.1} parent=1 // pred_check
      _
    $region7: #{multi_class_net.1} parent=1 // pred_check_branch
      %19 = sbr.rel (0) target = $region9
    $region8: #{multi_class_net.1} parent=1 // pred_region
      _
    $region9: #{multi_class_net.1} parent=1 // pred_fallthru
      _
    // Predicated region
    $region10: #{multi_class_net.1} parent=1 // pred_check
      _
    $region11: #{multi_class_net.1} parent=1 // pred_check_branch
      %21 = sbr.rel (0) target = $region13
    $region12: #{multi_class_net.1} parent=1 // pred_region
      %22 = dma.done [#allocation3], 16
    $region13: #{multi_class_net.1} parent=1 // pred_fallthru
      _
    %23 = sfence
    %v24 = vld [vmem:[%s1] sm:$0xff]
    %v25 = vld [vmem:[%s1 + $0x8] sm:$0xff]
    %s26 = scalar_lea.vmem %s1, 16
    %v27 = vld [vmem:[%s26] sm:$0xff]
    %v28 = vld [vmem:[%s26 + $0x8] sm:$0xff]
    %s29 = sld [smem:[#allocation2]]
    %v30 = vstv %s29
    %v31 = vmul.f32 %v30, %v24
    %v32 = vmul.f32 %v30, %v25
    %s33 = sld [smem:[#allocation2 + $0x1]]
    %v34 = vstv %s33
    %v35 = vmul.f32 %v34, %v27
    %v36 = vmul.f32 %v34, %v28
    %v37 = vadd.f32 %v31, %v35
    %v38 = vadd.f32 %v32, %v36
    %s39 = sld [smem:[#allocation2 + $0x8]]
    %v40 = vstv %s39
    %v41 = vadd.f32 %v37, %v40
    %v42 = vadd.f32 %v38, %v40
    %v43 = vmax.f32 %v41, 0.0
    %v44 = vmax.f32 %v42, 0.0
    %s45 = sld [smem:[#allocation2 + $0x2]]
    %v46 = vstv %s45
    %v47 = vmul.f32 %v46, %v24
    %v48 = vmul.f32 %v46, %v25
    %s49 = sld [smem:[#allocation2 + $0x3]]
    %v50 = vstv %s49
    %v51 = vmul.f32 %v50, %v27
    %v52 = vmul.f32 %v50, %v28
    %v53 = vadd.f32 %v47, %v51
    %v54 = vadd.f32 %v48, %v52
    %s55 = sld [smem:[#allocation2 + $0x9]]
    %v56 = vstv %s55
    %v57 = vadd.f32 %v53, %v56
    %v58 = vadd.f32 %v54, %v56
    %v59 = vmax.f32 %v57, 0.0
    %v60 = vmax.f32 %v58, 0.0
    %s61 = sld [smem:[#allocation2 + $0x4]]
    %v62 = vstv %s61
    %v63 = vmul.f32 %v62, %v24
    %v64 = vmul.f32 %v62, %v25
    %s65 = sld [smem:[#allocation2 + $0x5]]
    %v66 = vstv %s65
    %v67 = vmul.f32 %v66, %v27
    %v68 = vmul.f32 %v66, %v28
    %v69 = vadd.f32 %v63, %v67
    %v70 = vadd.f32 %v64, %v68
    %s71 = sld [smem:[#allocation2 + $0xa]]
    %v72 = vstv %s71
    %v73 = vadd.f32 %v69, %v72
    %v74 = vadd.f32 %v70, %v72
    %v75 = vmax.f32 %v73, 0.0
    %v76 = vmax.f32 %v74, 0.0
    %s77 = sld [smem:[#allocation2 + $0x6]]
    %v78 = vstv %s77
    %v79 = vmul.f32 %v78, %v24
    %v80 = vmul.f32 %v78, %v25
    %s81 = sld [smem:[#allocation2 + $0x7]]
    %v82 = vstv %s81
    %v83 = vmul.f32 %v82, %v27
    %v84 = vmul.f32 %v82, %v28
    %v85 = vadd.f32 %v79, %v83
    %v86 = vadd.f32 %v80, %v84
    %s87 = sld [smem:[#allocation2 + $0xb]]
    %v88 = vstv %s87
    %v89 = vadd.f32 %v85, %v88
    %v90 = vadd.f32 %v86, %v88
    %v91 = vmax.f32 %v89, 0.0
    %v92 = vmax.f32 %v90, 0.0
    %s93 = sld [smem:[#allocation2 + $0xc]]
    %v94 = vstv %s93
    %v95 = vmul.f32 %v94, %v43
    %v96 = vmul.f32 %v94, %v44
    %s97 = sld [smem:[#allocation2 + $0xd]]
    %v98 = vstv %s97
    %v99 = vmul.f32 %v98, %v59
    %v100 = vmul.f32 %v98, %v60
    %v101 = vadd.f32 %v95, %v99
    %v102 = vadd.f32 %v96, %v100
    %s103 = sld [smem:[#allocation2 + $0xe]]
    %v104 = vstv %s103
    %v105 = vmul.f32 %v104, %v75
    %v106 = vmul.f32 %v104, %v76
    %v107 = vadd.f32 %v101, %v105
    %v108 = vadd.f32 %v102, %v106
    %s109 = sld [smem:[#allocation2 + $0xf]]
    %v110 = vstv %s109
    %v111 = vmul.f32 %v110, %v91
    %v112 = vmul.f32 %v110, %v92
    %v113 = vadd.f32 %v107, %v111
    %v114 = vadd.f32 %v108, %v112
    %s115 = sld [smem:[#allocation2 + $0x18]]
    %v116 = vstv %s115
    %v117 = vadd.f32 %v113, %v116
    %v118 = vadd.f32 %v114, %v116
    %s119 = sld [smem:[#allocation2 + $0x10]]
    %v120 = vstv %s119
    %v121 = vmul.f32 %v120, %v43
    %v122 = vmul.f32 %v120, %v44
    %s123 = sld [smem:[#allocation2 + $0x11]]
    %v124 = vstv %s123
    %v125 = vmul.f32 %v124, %v59
    %v126 = vmul.f32 %v124, %v60
    %v127 = vadd.f32 %v121, %v125
    %v128 = vadd.f32 %v122, %v126
    %s129 = sld [smem:[#allocation2 + $0x12]]
    %v130 = vstv %s129
    %v131 = vmul.f32 %v130, %v75
    %v132 = vmul.f32 %v130, %v76
    %v133 = vadd.f32 %v127, %v131
    %v134 = vadd.f32 %v128, %v132
    %s135 = sld [smem:[#allocation2 + $0x13]]
    %v136 = vstv %s135
    %v137 = vmul.f32 %v136, %v91
    %v138 = vmul.f32 %v136, %v92
    %v139 = vadd.f32 %v133, %v137
    %v140 = vadd.f32 %v134, %v138
    %s141 = sld [smem:[#allocation2 + $0x19]]
    %v142 = vstv %s141
    %v143 = vadd.f32 %v139, %v142
    %v144 = vadd.f32 %v140, %v142
    %s145 = sld [smem:[#allocation2 + $0x14]]
    %v146 = vstv %s145
    %v147 = vmul.f32 %v146, %v43
    %v148 = vmul.f32 %v146, %v44
    %s149 = sld [smem:[#allocation2 + $0x15]]
    %v150 = vstv %s149
    %v151 = vmul.f32 %v150, %v59
    %v152 = vmul.f32 %v150, %v60
    %v153 = vadd.f32 %v147, %v151
    %v154 = vadd.f32 %v148, %v152
    %s155 = sld [smem:[#allocation2 + $0x16]]
    %v156 = vstv %s155
    %v157 = vmul.f32 %v156, %v75
    %v158 = vmul.f32 %v156, %v76
    %v159 = vadd.f32 %v153, %v157
    %v160 = vadd.f32 %v154, %v158
    %s161 = sld [smem:[#allocation2 + $0x17]]
    %v162 = vstv %s161
    %v163 = vmul.f32 %v162, %v91
    %v164 = vmul.f32 %v162, %v92
    %v165 = vadd.f32 %v159, %v163
    %v166 = vadd.f32 %v160, %v164
    %s167 = sld [smem:[#allocation2 + $0x1a]]
    %v168 = vstv %s167
    %v169 = vadd.f32 %v165, %v168
    %v170 = vadd.f32 %v166, %v168
    %v171 = vmax.f32 %v117, %v143
    %v172 = vmax.f32 %v118, %v144
    %v173 = vmax.f32 %v171, %v169
    %v174 = vmax.f32 %v172, %v170
    %v175 = vsub.f32 %v117, %v173
    %v176 = vsub.f32 %v118, %v174
    %v177 = vmul.f32 %v175, 1.442695
    %v178 = vpow.pop %v177
    %v179 = vmul.f32 %v176, 1.442695
    %v180 = vpow.pop %v179
    %v181 = vsub.f32 %v143, %v173
    %v182 = vsub.f32 %v144, %v174
    %v183 = vmul.f32 %v181, 1.442695
    %v184 = vpow.pop %v183
    %v185 = vmul.f32 %v182, 1.442695
    %v186 = vpow.pop %v185
    %v187 = vadd.f32 %v178, %v184
    %v188 = vadd.f32 %v180, %v186
    %v189 = vsub.f32 %v169, %v173
    %v190 = vsub.f32 %v170, %v174
    %v191 = vmul.f32 %v189, 1.442695
    %v192 = vpow.pop %v191
    %v193 = vmul.f32 %v190, 1.442695
    %v194 = vpow.pop %v193
    %v195 = vadd.f32 %v187, %v192
    %v196 = vadd.f32 %v188, %v194
    %v197 = vrcp.pop %v195
    %v198 = vrcp.pop %v196
    %v199 = vmul.f32 %v178, %v197
    %v200 = vmul.f32 %v180, %v198
    %201 = vst [vmem:[%s2] sm:$0xff] %v199
    %202 = vst [vmem:[%s2 + $0x8] sm:$0xff] %v200
    %v203 = vmul.f32 %v184, %v197
    %v204 = vmul.f32 %v186, %v198
    %s205 = scalar_lea.vmem %s2, 16
    %206 = vst [vmem:[%s205] sm:$0xff] %v203
    %207 = vst [vmem:[%s205 + $0x8] sm:$0xff] %v204
    %v208 = vmul.f32 %v192, %v197
    %v209 = vmul.f32 %v194, %v198
    %s210 = scalar_lea.vmem %s2, 32
    %211 = vst [vmem:[%s210] sm:$0xff] %v208
    %212 = vst [vmem:[%s210 + $0x8] sm:$0xff] %v209
    // Predicated region
    $region14: #{multi_class_net.1} parent=1 // pred_check
      _
    $region15: #{multi_class_net.1} parent=1 // pred_check_branch
      %214 = sbr.rel (0) target = $region17
    $region16: #{multi_class_net.1} parent=1 // pred_region
      _
    $region17: #{multi_class_net.1} parent=1 // pred_fallthru
      _
    // Predicated region
    $region18: #{multi_class_net.1} parent=1 // pred_check
      _
    $region19: #{multi_class_net.1} parent=1 // pred_check_branch
      %216 = sbr.rel (0) target = $region21
    $region20: #{multi_class_net.1} parent=1 // pred_region
      _
    $region21: #{multi_class_net.1} parent=1 // pred_fallthru
      _
    %217 = vsyncpa [#allocation3], 1

</llo_original>
